<compile_context>
chip_gen: v5e
topology: v5e:2x2
jax: 0.10.0
libtpu: 0.0.40
codegen_flags: <defaults>
</compile_context>

<pallas_src>
import math

import jax
import jax.numpy as jnp
from jax.experimental import pallas as pl
from jax.experimental.pallas import tpu as pltpu

NOISE_STD = 0.08

# Batcher odd-even mergesort network for 8 inputs (19 compare-exchanges).
_SORT8_NETWORK = (
    (0, 1), (2, 3), (4, 5), (6, 7),
    (0, 2), (1, 3), (1, 2),
    (4, 6), (5, 7), (5, 6),
    (0, 4), (1, 5), (2, 6), (3, 7),
    (2, 4), (3, 5),
    (1, 2), (3, 4), (5, 6),
)


def _sorted_vals(vals):
    """Per-lane sort of a list of equally-shaped arrays via a sorting network."""
    n = len(vals)
    if n == 8:
        net = _SORT8_NETWORK
    else:  # generic odd-even transposition network for other (small) n
        net = []
        for r in range(n):
            net.extend((i, i + 1) for i in range(r % 2, n - 1, 2))
    vals = list(vals)
    for i, j in net:
        lo = jnp.minimum(vals[i], vals[j])
        hi = jnp.maximum(vals[i], vals[j])
        vals[i], vals[j] = lo, hi
    return vals


def _linear_quantile(sorted_vals, q):
    """Linear-interpolated quantile (matches torch/jnp default 'linear' method)."""
    n = len(sorted_vals)
    pos = q * (n - 1)
    idx = min(int(math.floor(pos)), n - 1)
    frac = pos - idx
    if idx >= n - 1 or frac == 0.0:
        return sorted_vals[idx]
    return sorted_vals[idx] + frac * (sorted_vals[idx + 1] - sorted_vals[idx])


def _make_ci_kernel(n_samples, alpha):
    q_lo = alpha / 2.0
    q_hi = 1.0 - alpha / 2.0
    inv_n = 1.0 / n_samples

    def kernel(x_ref, noise_ref, preds_ref, mean_ref, lo_ref, hi_ref):
        x = x_ref[...]
        state = x
        acc = jnp.zeros_like(x)
        preds = []
        # n_samples is small and static -> fully unrolled MC loop, single kernel step.
        for s in range(n_samples):
            state = state + noise_ref[s]        # cumulative noising (x_data reassigned)
            pred = state                        # identity stand-in for abstract forward()
            preds_ref[s] = pred
            acc = acc + pred
            preds.append(pred)

        mean_ref[...] = acc * inv_n             # multiply by 1/n, not vector divide

        svals = _sorted_vals(preds)             # per-lane sorting network (VPU)
        lo_ref[...] = _linear_quantile(svals, q_lo)
        hi_ref[...] = _linear_quantile(svals, q_hi)

    return kernel


def predict_with_confidence_interval(x_nchw, seed=0, n_samples=8, alpha=0.05):
    orig_shape = x_nchw.shape
    total = int(x_nchw.size)

    # Sublane/lane-dense packing: (8, total // 8) when possible (full vreg rows).
    rows = 8 if total % (8 * 128) == 0 else 1
    cols = total // rows
    x2d = x_nchw.reshape(rows, cols).astype(jnp.float32)

    # Host-side noise (scaled): kernel just adds the precomputed increments.
    noise = (
        jax.random.normal(jax.random.PRNGKey(seed), (n_samples, rows, cols), jnp.float32)
        * NOISE_STD
    )

    # Lane tiling: one tile at small sizes; multiple parallel tiles when cols grows
    # (keeps per-tile VMEM footprint bounded and lets v7x shard across TensorCores).
    tile_c = cols
    for cand in (2048, 1024, 512, 256):
        if cols > cand and cols % cand == 0:
            tile_c = cand
            break
    num_tiles = cols // tile_c

    kernel = _make_ci_kernel(n_samples, alpha)

    preds, mean, lower, upper = pl.pallas_call(
        kernel,
        out_shape=(
            jax.ShapeDtypeStruct((n_samples, rows, cols), jnp.float32),
            jax.ShapeDtypeStruct((rows, cols), jnp.float32),
            jax.ShapeDtypeStruct((rows, cols), jnp.float32),
            jax.ShapeDtypeStruct((rows, cols), jnp.float32),
        ),
        grid=(num_tiles,),
        in_specs=[
            pl.BlockSpec((rows, tile_c), lambda j: (0, j)),
            pl.BlockSpec((n_samples, rows, tile_c), lambda j: (0, 0, j)),
        ],
        out_specs=[
            pl.BlockSpec((n_samples, rows, tile_c), lambda j: (0, 0, j)),
            pl.BlockSpec((rows, tile_c), lambda j: (0, j)),
            pl.BlockSpec((rows, tile_c), lambda j: (0, j)),
            pl.BlockSpec((rows, tile_c), lambda j: (0, j)),
        ],
        compiler_params=pltpu.CompilerParams(
            dimension_semantics=("parallel",),   # feature tiles are independent
            vmem_limit_bytes=32 * 1024 * 1024,   # safe on v5e/v6e/v7x at these tiles
        ),
    )(x2d, noise)

    predicted_mean = mean.reshape(orig_shape)
    lower_bound = lower.reshape(orig_shape)
    upper_bound = upper.reshape(orig_shape)
    preds_full = preds.reshape((n_samples,) + tuple(orig_shape))
    return predicted_mean, lower_bound, upper_bound, preds_full


if __name__ == "__main__":
    key = jax.random.PRNGKey(0)
    B, C, H, W = 2, 4, 16, 16
    x = jax.random.normal(key, (B, C, H, W), dtype=jnp.float32)

    n_samples, alpha = 8, 0.05
    mean, lo, hi, preds = predict_with_confidence_interval(
        x, seed=0, n_samples=n_samples, alpha=alpha
    )
    jax.block_until_ready((mean, lo, hi, preds))

    # Consistency: mean / quantiles recomputed in pure JAX from the kernel's own
    # per-sample predictions must match the fused in-kernel values.
    preds_flat = preds.reshape(n_samples, -1)
    ref_mean = preds_flat.mean(axis=0).reshape(B, C, H, W)
    ref_lo = jnp.quantile(preds_flat, alpha / 2.0, axis=0).reshape(B, C, H, W)
    ref_hi = jnp.quantile(preds_flat, 1.0 - alpha / 2.0, axis=0).reshape(B, C, H, W)
    assert jnp.allclose(mean, ref_mean, atol=1e-5), "mean mismatch"
    assert jnp.allclose(lo, ref_lo, atol=1e-5), "lower-bound mismatch"
    assert jnp.allclose(hi, ref_hi, atol=1e-5), "upper-bound mismatch"
    assert bool(jnp.all(lo <= hi)), "quantile ordering violated"

    # Cumulative-noising structure: per-sample increments are i.i.d. N(0, NOISE_STD).
    x_flat = x.reshape(-1)
    increments = jnp.concatenate(
        [(preds_flat[0] - x_flat)[None], preds_flat[1:] - preds_flat[:-1]], axis=0
    )
    inc_std = float(jnp.std(increments))
    inc_mean = float(jnp.mean(increments))
    assert 0.05 < inc_std < 0.11, f"noise std off: {inc_std}"
    assert abs(inc_mean) < 0.02, f"noise mean off: {inc_mean}"

    print("KERNEL_OK")
</pallas_src>

<mosaic_0001>
module attributes {stable_mosaic.version = 11 : i64} {
  func.func @kernel(%arg0: i32, %arg1: memref<8x256xf32, #tpu.memory_space<vmem>>, %arg2: memref<8x8x256xf32, #tpu.memory_space<vmem>>, %arg3: memref<8x8x256xf32, #tpu.memory_space<vmem>>, %arg4: memref<8x256xf32, #tpu.memory_space<vmem>>, %arg5: memref<8x256xf32, #tpu.memory_space<vmem>>, %arg6: memref<8x256xf32, #tpu.memory_space<vmem>>) attributes {dimension_semantics = [#tpu.dimension_semantics<parallel>], iteration_bounds = array<i64: 1>, scalar_prefetch = 0 : i64, scratch_operands = 0 : i64, tpu.core_type = #tpu.core_type<tc>, window_params = [{transform_indices = @transform_0, window_bounds = array<i64: 8, 256>}, {transform_indices = @transform_1, window_bounds = array<i64: 8, 8, 256>}, {transform_indices = @transform_2, window_bounds = array<i64: 8, 8, 256>}, {transform_indices = @transform_3, window_bounds = array<i64: 8, 256>}, {transform_indices = @transform_4, window_bounds = array<i64: 8, 256>}, {transform_indices = @transform_5, window_bounds = array<i64: 8, 256>}]} {
    %c0 = arith.constant 0 : index
    %c0_0 = arith.constant 0 : index
    %0 = vector.load %arg1[%c0, %c0_0] : memref<8x256xf32, #tpu.memory_space<vmem>>, vector<8x256xf32>
    %cst = arith.constant 0.000000e+00 : f32
    %1 = vector.broadcast %cst : f32 to vector<8x256xf32>
    %c0_1 = arith.constant 0 : index
    %c0_2 = arith.constant 0 : index
    %c0_3 = arith.constant 0 : index
    %2 = vector.load %arg2[%c0_1, %c0_2, %c0_3] : memref<8x8x256xf32, #tpu.memory_space<vmem>>, vector<1x8x256xf32>
    %3 = vector.shape_cast %2 : vector<1x8x256xf32> to vector<8x256xf32>
    %4 = arith.addf %0, %3 : vector<8x256xf32>
    %c0_4 = arith.constant 0 : index
    %c0_5 = arith.constant 0 : index
    %c0_6 = arith.constant 0 : index
    %5 = vector.load %arg3[%c0_4, %c0_5, %c0_6] : memref<8x8x256xf32, #tpu.memory_space<vmem>>, vector<1x8x256xf32>
    %6 = vector.shape_cast %5 : vector<1x8x256xf32> to vector<8x256xf32>
    %7 = vector.shape_cast %4 : vector<8x256xf32> to vector<1x8x256xf32>
    tpu.vector_store %arg3[%c0_4, %c0_5, %c0_6], %7 {strides = array<i32>} : memref<8x8x256xf32, #tpu.memory_space<vmem>>, vector<1x8x256xf32>,
    %8 = arith.addf %1, %4 : vector<8x256xf32>
    %c1 = arith.constant 1 : index
    %c0_7 = arith.constant 0 : index
    %c0_8 = arith.constant 0 : index
    %9 = vector.load %arg2[%c1, %c0_7, %c0_8] : memref<8x8x256xf32, #tpu.memory_space<vmem>>, vector<1x8x256xf32>
    %10 = vector.shape_cast %9 : vector<1x8x256xf32> to vector<8x256xf32>
    %11 = arith.addf %4, %10 : vector<8x256xf32>
    %c1_9 = arith.constant 1 : index
    %c0_10 = arith.constant 0 : index
    %c0_11 = arith.constant 0 : index
    %12 = vector.load %arg3[%c1_9, %c0_10, %c0_11] : memref<8x8x256xf32, #tpu.memory_space<vmem>>, vector<1x8x256xf32>
    %13 = vector.shape_cast %12 : vector<1x8x256xf32> to vector<8x256xf32>
    %14 = vector.shape_cast %11 : vector<8x256xf32> to vector<1x8x256xf32>
    tpu.vector_store %arg3[%c1_9, %c0_10, %c0_11], %14 {strides = array<i32>} : memref<8x8x256xf32, #tpu.memory_space<vmem>>, vector<1x8x256xf32>,
    %15 = arith.addf %8, %11 : vector<8x256xf32>
    %c2 = arith.constant 2 : index
    %c0_12 = arith.constant 0 : index
    %c0_13 = arith.constant 0 : index
    %16 = vector.load %arg2[%c2, %c0_12, %c0_13] : memref<8x8x256xf32, #tpu.memory_space<vmem>>, vector<1x8x256xf32>
    %17 = vector.shape_cast %16 : vector<1x8x256xf32> to vector<8x256xf32>
    %18 = arith.addf %11, %17 : vector<8x256xf32>
    %c2_14 = arith.constant 2 : index
    %c0_15 = arith.constant 0 : index
    %c0_16 = arith.constant 0 : index
    %19 = vector.load %arg3[%c2_14, %c0_15, %c0_16] : memref<8x8x256xf32, #tpu.memory_space<vmem>>, vector<1x8x256xf32>
    %20 = vector.shape_cast %19 : vector<1x8x256xf32> to vector<8x256xf32>
    %21 = vector.shape_cast %18 : vector<8x256xf32> to vector<1x8x256xf32>
    tpu.vector_store %arg3[%c2_14, %c0_15, %c0_16], %21 {strides = array<i32>} : memref<8x8x256xf32, #tpu.memory_space<vmem>>, vector<1x8x256xf32>,
    %22 = arith.addf %15, %18 : vector<8x256xf32>
    %c3 = arith.constant 3 : index
    %c0_17 = arith.constant 0 : index
    %c0_18 = arith.constant 0 : index
    %23 = vector.load %arg2[%c3, %c0_17, %c0_18] : memref<8x8x256xf32, #tpu.memory_space<vmem>>, vector<1x8x256xf32>
    %24 = vector.shape_cast %23 : vector<1x8x256xf32> to vector<8x256xf32>
    %25 = arith.addf %18, %24 : vector<8x256xf32>
    %c3_19 = arith.constant 3 : index
    %c0_20 = arith.constant 0 : index
    %c0_21 = arith.constant 0 : index
    %26 = vector.load %arg3[%c3_19, %c0_20, %c0_21] : memref<8x8x256xf32, #tpu.memory_space<vmem>>, vector<1x8x256xf32>
    %27 = vector.shape_cast %26 : vector<1x8x256xf32> to vector<8x256xf32>
    %28 = vector.shape_cast %25 : vector<8x256xf32> to vector<1x8x256xf32>
    tpu.vector_store %arg3[%c3_19, %c0_20, %c0_21], %28 {strides = array<i32>} : memref<8x8x256xf32, #tpu.memory_space<vmem>>, vector<1x8x256xf32>,
    %29 = arith.addf %22, %25 : vector<8x256xf32>
    %c4 = arith.constant 4 : index
    %c0_22 = arith.constant 0 : index
    %c0_23 = arith.constant 0 : index
    %30 = vector.load %arg2[%c4, %c0_22, %c0_23] : memref<8x8x256xf32, #tpu.memory_space<vmem>>, vector<1x8x256xf32>
    %31 = vector.shape_cast %30 : vector<1x8x256xf32> to vector<8x256xf32>
    %32 = arith.addf %25, %31 : vector<8x256xf32>
    %c4_24 = arith.constant 4 : index
    %c0_25 = arith.constant 0 : index
    %c0_26 = arith.constant 0 : index
    %33 = vector.load %arg3[%c4_24, %c0_25, %c0_26] : memref<8x8x256xf32, #tpu.memory_space<vmem>>, vector<1x8x256xf32>
    %34 = vector.shape_cast %33 : vector<1x8x256xf32> to vector<8x256xf32>
    %35 = vector.shape_cast %32 : vector<8x256xf32> to vector<1x8x256xf32>
    tpu.vector_store %arg3[%c4_24, %c0_25, %c0_26], %35 {strides = array<i32>} : memref<8x8x256xf32, #tpu.memory_space<vmem>>, vector<1x8x256xf32>,
    %36 = arith.addf %29, %32 : vector<8x256xf32>
    %c5 = arith.constant 5 : index
    %c0_27 = arith.constant 0 : index
    %c0_28 = arith.constant 0 : index
    %37 = vector.load %arg2[%c5, %c0_27, %c0_28] : memref<8x8x256xf32, #tpu.memory_space<vmem>>, vector<1x8x256xf32>
    %38 = vector.shape_cast %37 : vector<1x8x256xf32> to vector<8x256xf32>
    %39 = arith.addf %32, %38 : vector<8x256xf32>
    %c5_29 = arith.constant 5 : index
    %c0_30 = arith.constant 0 : index
    %c0_31 = arith.constant 0 : index
    %40 = vector.load %arg3[%c5_29, %c0_30, %c0_31] : memref<8x8x256xf32, #tpu.memory_space<vmem>>, vector<1x8x256xf32>
    %41 = vector.shape_cast %40 : vector<1x8x256xf32> to vector<8x256xf32>
    %42 = vector.shape_cast %39 : vector<8x256xf32> to vector<1x8x256xf32>
    tpu.vector_store %arg3[%c5_29, %c0_30, %c0_31], %42 {strides = array<i32>} : memref<8x8x256xf32, #tpu.memory_space<vmem>>, vector<1x8x256xf32>,
    %43 = arith.addf %36, %39 : vector<8x256xf32>
    %c6 = arith.constant 6 : index
    %c0_32 = arith.constant 0 : index
    %c0_33 = arith.constant 0 : index
    %44 = vector.load %arg2[%c6, %c0_32, %c0_33] : memref<8x8x256xf32, #tpu.memory_space<vmem>>, vector<1x8x256xf32>
    %45 = vector.shape_cast %44 : vector<1x8x256xf32> to vector<8x256xf32>
    %46 = arith.addf %39, %45 : vector<8x256xf32>
    %c6_34 = arith.constant 6 : index
    %c0_35 = arith.constant 0 : index
    %c0_36 = arith.constant 0 : index
    %47 = vector.load %arg3[%c6_34, %c0_35, %c0_36] : memref<8x8x256xf32, #tpu.memory_space<vmem>>, vector<1x8x256xf32>
    %48 = vector.shape_cast %47 : vector<1x8x256xf32> to vector<8x256xf32>
    %49 = vector.shape_cast %46 : vector<8x256xf32> to vector<1x8x256xf32>
    tpu.vector_store %arg3[%c6_34, %c0_35, %c0_36], %49 {strides = array<i32>} : memref<8x8x256xf32, #tpu.memory_space<vmem>>, vector<1x8x256xf32>,
    %50 = arith.addf %43, %46 : vector<8x256xf32>
    %c7 = arith.constant 7 : index
    %c0_37 = arith.constant 0 : index
    %c0_38 = arith.constant 0 : index
    %51 = vector.load %arg2[%c7, %c0_37, %c0_38] : memref<8x8x256xf32, #tpu.memory_space<vmem>>, vector<1x8x256xf32>
    %52 = vector.shape_cast %51 : vector<1x8x256xf32> to vector<8x256xf32>
    %53 = arith.addf %46, %52 : vector<8x256xf32>
    %c7_39 = arith.constant 7 : index
    %c0_40 = arith.constant 0 : index
    %c0_41 = arith.constant 0 : index
    %54 = vector.load %arg3[%c7_39, %c0_40, %c0_41] : memref<8x8x256xf32, #tpu.memory_space<vmem>>, vector<1x8x256xf32>
    %55 = vector.shape_cast %54 : vector<1x8x256xf32> to vector<8x256xf32>
    %56 = vector.shape_cast %53 : vector<8x256xf32> to vector<1x8x256xf32>
    tpu.vector_store %arg3[%c7_39, %c0_40, %c0_41], %56 {strides = array<i32>} : memref<8x8x256xf32, #tpu.memory_space<vmem>>, vector<1x8x256xf32>,
    %57 = arith.addf %50, %53 : vector<8x256xf32>
    %cst_42 = arith.constant 1.250000e-01 : f32
    %58 = vector.broadcast %cst_42 : f32 to vector<8x256xf32>
    %59 = arith.mulf %57, %58 : vector<8x256xf32>
    %c0_43 = arith.constant 0 : index
    %c0_44 = arith.constant 0 : index
    %60 = vector.load %arg4[%c0_43, %c0_44] : memref<8x256xf32, #tpu.memory_space<vmem>>, vector<8x256xf32>
    tpu.vector_store %arg4[%c0_43, %c0_44], %59 {strides = array<i32>} : memref<8x256xf32, #tpu.memory_space<vmem>>, vector<8x256xf32>,
    %61 = arith.minimumf %4, %11 : vector<8x256xf32>
    %62 = arith.maximumf %4, %11 : vector<8x256xf32>
    %63 = arith.minimumf %18, %25 : vector<8x256xf32>
    %64 = arith.maximumf %18, %25 : vector<8x256xf32>
    %65 = arith.minimumf %32, %39 : vector<8x256xf32>
    %66 = arith.maximumf %32, %39 : vector<8x256xf32>
    %67 = arith.minimumf %46, %53 : vector<8x256xf32>
    %68 = arith.maximumf %46, %53 : vector<8x256xf32>
    %69 = arith.minimumf %61, %63 : vector<8x256xf32>
    %70 = arith.maximumf %61, %63 : vector<8x256xf32>
    %71 = arith.minimumf %62, %64 : vector<8x256xf32>
    %72 = arith.maximumf %62, %64 : vector<8x256xf32>
    %73 = arith.minimumf %71, %70 : vector<8x256xf32>
    %74 = arith.maximumf %71, %70 : vector<8x256xf32>
    %75 = arith.minimumf %65, %67 : vector<8x256xf32>
    %76 = arith.maximumf %65, %67 : vector<8x256xf32>
    %77 = arith.minimumf %66, %68 : vector<8x256xf32>
    %78 = arith.maximumf %66, %68 : vector<8x256xf32>
    %79 = arith.minimumf %77, %76 : vector<8x256xf32>
    %80 = arith.maximumf %77, %76 : vector<8x256xf32>
    %81 = arith.minimumf %69, %75 : vector<8x256xf32>
    %82 = arith.maximumf %69, %75 : vector<8x256xf32>
    %83 = arith.minimumf %73, %79 : vector<8x256xf32>
    %84 = arith.maximumf %73, %79 : vector<8x256xf32>
    %85 = arith.minimumf %74, %80 : vector<8x256xf32>
    %86 = arith.maximumf %74, %80 : vector<8x256xf32>
    %87 = arith.minimumf %72, %78 : vector<8x256xf32>
    %88 = arith.maximumf %72, %78 : vector<8x256xf32>
    %89 = arith.minimumf %85, %82 : vector<8x256xf32>
    %90 = arith.maximumf %87, %84 : vector<8x256xf32>
    %91 = arith.minimumf %83, %89 : vector<8x256xf32>
    %92 = arith.maximumf %90, %86 : vector<8x256xf32>
    %93 = arith.subf %91, %81 : vector<8x256xf32>
    %cst_45 = arith.constant 1.750000e-01 : f32
    %94 = vector.broadcast %cst_45 : f32 to vector<8x256xf32>
    %95 = arith.mulf %94, %93 : vector<8x256xf32>
    %96 = arith.addf %81, %95 : vector<8x256xf32>
    %c0_46 = arith.constant 0 : index
    %c0_47 = arith.constant 0 : index
    %97 = vector.load %arg5[%c0_46, %c0_47] : memref<8x256xf32, #tpu.memory_space<vmem>>, vector<8x256xf32>
    tpu.vector_store %arg5[%c0_46, %c0_47], %96 {strides = array<i32>} : memref<8x256xf32, #tpu.memory_space<vmem>>, vector<8x256xf32>,
    %98 = arith.subf %88, %92 : vector<8x256xf32>
    %cst_48 = arith.constant 0.824999988 : f32
    %99 = vector.broadcast %cst_48 : f32 to vector<8x256xf32>
    %100 = arith.mulf %99, %98 : vector<8x256xf32>
    %101 = arith.addf %92, %100 : vector<8x256xf32>
    %c0_49 = arith.constant 0 : index
    %c0_50 = arith.constant 0 : index
    %102 = vector.load %arg6[%c0_49, %c0_50] : memref<8x256xf32, #tpu.memory_space<vmem>>, vector<8x256xf32>
    tpu.vector_store %arg6[%c0_49, %c0_50], %101 {strides = array<i32>} : memref<8x256xf32, #tpu.memory_space<vmem>>, vector<8x256xf32>,
    return
  }
  func.func @transform_0(%arg0: i32) -> (i32, i32) {
    %c0_i32 = arith.constant 0 : i32
    %c0_i32_0 = arith.constant 0 : i32
    return %c0_i32, %arg0 : i32, i32
  }
  func.func @transform_1(%arg0: i32) -> (i32, i32, i32) {
    %c0_i32 = arith.constant 0 : i32
    %c0_i32_0 = arith.constant 0 : i32
    %c0_i32_1 = arith.constant 0 : i32
    return %c0_i32, %c0_i32_0, %arg0 : i32, i32, i32
  }
  func.func @transform_2(%arg0: i32) -> (i32, i32, i32) {
    %c0_i32 = arith.constant 0 : i32
    %c0_i32_0 = arith.constant 0 : i32
    %c0_i32_1 = arith.constant 0 : i32
    return %c0_i32, %c0_i32_0, %arg0 : i32, i32, i32
  }
  func.func @transform_3(%arg0: i32) -> (i32, i32) {
    %c0_i32 = arith.constant 0 : i32
    %c0_i32_0 = arith.constant 0 : i32
    return %c0_i32, %arg0 : i32, i32
  }
  func.func @transform_4(%arg0: i32) -> (i32, i32) {
    %c0_i32 = arith.constant 0 : i32
    %c0_i32_0 = arith.constant 0 : i32
    return %c0_i32, %arg0 : i32, i32
  }
  func.func @transform_5(%arg0: i32) -> (i32, i32) {
    %c0_i32 = arith.constant 0 : i32
    %c0_i32_0 = arith.constant 0 : i32
    return %c0_i32, %arg0 : i32, i32
  }
}

</mosaic_0001>

<llo_original>
// kernel: tpu_custom_call.1
$region0: #{tpu_custom_call.1}
  #allocation0 [shape = 'u32[]', space=smem, size = 0x4, offset = 0x4, fixed_abs, tag = 'smem constant byte address 0x4 - core index']
  #allocation1 [shape = 'u32[72,128]{1,0:T(1,128)}', space=vmem, size = 0x9000, scoped, tag = 'internal scratch']
  %s0 = inlined_call_operand.hbm [shape: f32[8,256], index: 0, kind: input, shape index: {}]
  %s1 = inlined_call_operand.hbm [shape: f32[8,8,256], index: 1, kind: input, shape index: {}]
  %s2 = inlined_call_operand.hbm [shape: f32[8,8,256], index: 2, kind: output, shape index: {0}]
  %s3 = inlined_call_operand.hbm [shape: f32[8,256], index: 3, kind: output, shape index: {1}]
  %s4 = inlined_call_operand.hbm [shape: f32[8,256], index: 4, kind: output, shape index: {2}]
  %s5 = inlined_call_operand.hbm [shape: f32[8,256], index: 5, kind: output, shape index: {3}]
  %6 = xla_tuple %s2, %s3, %s4, %s5
  %s7 = sld [smem:[#allocation0]]
  $region50: #{tpu_custom_call.1} parent=0
    _
  %s9 = ssub.s32 1, %s7
  %s10 = scalar_select 0, %s9, %s7
  $region1: #{tpu_custom_call.1} parent=0
    #allocation2 [shape = 'u8[8192]{0}', space=vmem, size = 0x2000, scoped, tag = 'input window, operand 0, single buffered']
    #allocation3 [shape = 's32[1]{0}', space=sflag, size = 0x4, scoped, tag = 'scoped memory for tpu_custom_call.1']
    #allocation4 [shape = 's32[1]{0}', space=sflag, size = 0x4, scoped, tag = 'scoped memory for tpu_custom_call.1']
    #allocation5 [shape = 'u8[65536]{0}', space=vmem, size = 0x10000, scoped, tag = 'input window, operand 1, single buffered']
    #allocation6 [shape = 's32[1]{0}', space=sflag, size = 0x4, scoped, tag = 'scoped memory for tpu_custom_call.1']
    #allocation7 [shape = 'u8[65536]{0}', space=vmem, size = 0x10000, scoped, tag = 'output window, operand 0, single buffered']
    #allocation8 [shape = 'u8[8192]{0}', space=vmem, size = 0x2000, scoped, tag = 'output window, operand 1, single buffered']
    #allocation9 [shape = 's32[1]{0}', space=sflag, size = 0x4, scoped, tag = 'scoped memory for tpu_custom_call.1']
    #allocation10 [shape = 'u8[8192]{0}', space=vmem, size = 0x2000, scoped, tag = 'output window, operand 2, single buffered']
    #allocation11 [shape = 'u8[8192]{0}', space=vmem, size = 0x2000, scoped, tag = 'output window, operand 3, single buffered']
    #allocation12 [shape = 's32[1]{0}', space=sflag, size = 0x4, scoped, tag = 'scoped memory for tpu_custom_call.1']
    %11 = vsyncpa [#allocation3], 0
    %12 = vsyncpa [#allocation6], 0
    %13 = vsyncpa [#allocation4], 0
    %14 = vsyncpa [#allocation9], 0
    %15 = vsyncpa [#allocation12], 0
    // Predicated region
    $region2: #{tpu_custom_call.1} parent=1 // pred_check
      _
    $region3: #{tpu_custom_call.1} parent=1 // pred_check_branch
      %17 = sbr.rel (0) target = $region5
    $region4: #{tpu_custom_call.1} parent=1 // pred_region
      %19 = vsyncadd [#allocation3], 0
      %s21 = sshll.u32 %s0, 4
      %s22 = int_to_ptr.hbm [resolvable:$true] %s21
      %s23 = sshll.u32 [#allocation2], 4
      %s24 = int_to_ptr.vmem [resolvable:$true] %s23
      %26 = dma.hbm_to_vmem [thread:$0]  %s22, 256, %s24, [#allocation3]
    $region5: #{tpu_custom_call.1} parent=1 // pred_fallthru
      _
    // Predicated region
    $region6: #{tpu_custom_call.1} parent=1 // pred_check
      _
    $region7: #{tpu_custom_call.1} parent=1 // pred_check_branch
      %28 = sbr.rel (0) target = $region9
    $region8: #{tpu_custom_call.1} parent=1 // pred_region
      %30 = vsyncadd [#allocation6], 0
      %s31 = sshll.u32 %s1, 4
      %s32 = int_to_ptr.hbm [resolvable:$true] %s31
      %s33 = sshll.u32 [#allocation5], 4
      %s34 = int_to_ptr.vmem [resolvable:$true] %s33
      %39 = dma.hbm_to_vmem [thread:$0]  %s32, 2048, %s34, [#allocation6], 256, 256, 16
    $region9: #{tpu_custom_call.1} parent=1 // pred_fallthru
      _
    // Predicated region
    $region10: #{tpu_custom_call.1} parent=1 // pred_check
      _
    $region11: #{tpu_custom_call.1} parent=1 // pred_check_branch
      %41 = sbr.rel (0) target = $region13
    $region12: #{tpu_custom_call.1} parent=1 // pred_region
      %43 = dma.done [#allocation3], 256
    $region13: #{tpu_custom_call.1} parent=1 // pred_fallthru
      _
    // Predicated region
    $region14: #{tpu_custom_call.1} parent=1 // pred_check
      _
    $region15: #{tpu_custom_call.1} parent=1 // pred_check_branch
      %45 = sbr.rel (0) target = $region17
    $region16: #{tpu_custom_call.1} parent=1 // pred_region
      %47 = dma.done [#allocation6], 2048
    $region17: #{tpu_custom_call.1} parent=1 // pred_fallthru
      _
    %v48 = vld [vmem:[#allocation2] sm:$0xff]
    %v49 = vld [vmem:[#allocation2 + $0x8] sm:$0xff]
    %v50 = vld [vmem:[#allocation5] sm:$0xff]
    %v51 = vld [vmem:[#allocation5 + $0x8] sm:$0xff]
    %v52 = vadd.f32 %v48, %v50
    %v53 = vadd.f32 %v49, %v51
    %54 = vst [vmem:[#allocation7] sm:$0xff] %v52
    %55 = vst [vmem:[#allocation7 + $0x8] sm:$0xff] %v53
    %v56 = vadd.f32 %v52, 0.0
    %v57 = vadd.f32 %v53, 0.0
    %s58 = scalar_lea.vmem [#allocation5], 16
    %v59 = vld [vmem:[%s58] sm:$0xff]
    %v60 = vld [vmem:[%s58 + $0x8] sm:$0xff]
    %v61 = vadd.f32 %v52, %v59
    %v62 = vadd.f32 %v53, %v60
    %s63 = scalar_lea.vmem [#allocation7], 16
    %64 = vst [vmem:[%s63] sm:$0xff] %v61
    %65 = vst [vmem:[%s63 + $0x8] sm:$0xff] %v62
    %v66 = vadd.f32 %v56, %v61
    %v67 = vadd.f32 %v57, %v62
    %s68 = scalar_lea.vmem [#allocation5], 32
    %v69 = vld [vmem:[%s68] sm:$0xff]
    %v70 = vld [vmem:[%s68 + $0x8] sm:$0xff]
    %v71 = vadd.f32 %v61, %v69
    %v72 = vadd.f32 %v62, %v70
    %s73 = scalar_lea.vmem [#allocation7], 32
    %74 = vst [vmem:[%s73] sm:$0xff] %v71
    %75 = vst [vmem:[%s73 + $0x8] sm:$0xff] %v72
    %v76 = vadd.f32 %v66, %v71
    %v77 = vadd.f32 %v67, %v72
    %s78 = scalar_lea.vmem [#allocation5], 48
    %v79 = vld [vmem:[%s78] sm:$0xff]
    %v80 = vld [vmem:[%s78 + $0x8] sm:$0xff]
    %v81 = vadd.f32 %v71, %v79
    %v82 = vadd.f32 %v72, %v80
    %s83 = scalar_lea.vmem [#allocation7], 48
    %84 = vst [vmem:[%s83] sm:$0xff] %v81
    %85 = vst [vmem:[%s83 + $0x8] sm:$0xff] %v82
    %v86 = vadd.f32 %v76, %v81
    %v87 = vadd.f32 %v77, %v82
    %s88 = scalar_lea.vmem [#allocation5], 64
    %v89 = vld [vmem:[%s88] sm:$0xff]
    %v90 = vld [vmem:[%s88 + $0x8] sm:$0xff]
    %v91 = vadd.f32 %v81, %v89
    %v92 = vadd.f32 %v82, %v90
    %s93 = scalar_lea.vmem [#allocation7], 64
    %94 = vst [vmem:[%s93] sm:$0xff] %v91
    %95 = vst [vmem:[%s93 + $0x8] sm:$0xff] %v92
    %v96 = vadd.f32 %v86, %v91
    %v97 = vadd.f32 %v87, %v92
    %s98 = scalar_lea.vmem [#allocation5], 80
    %v99 = vld [vmem:[%s98] sm:$0xff]
    %v100 = vld [vmem:[%s98 + $0x8] sm:$0xff]
    %v101 = vadd.f32 %v91, %v99
    %v102 = vadd.f32 %v92, %v100
    %s103 = scalar_lea.vmem [#allocation7], 80
    %104 = vst [vmem:[%s103] sm:$0xff] %v101
    %105 = vst [vmem:[%s103 + $0x8] sm:$0xff] %v102
    %v106 = vadd.f32 %v96, %v101
    %v107 = vadd.f32 %v97, %v102
    %s108 = scalar_lea.vmem [#allocation5], 96
    %v109 = vld [vmem:[%s108] sm:$0xff]
    %v110 = vld [vmem:[%s108 + $0x8] sm:$0xff]
    %v111 = vadd.f32 %v101, %v109
    %v112 = vadd.f32 %v102, %v110
    %s113 = scalar_lea.vmem [#allocation7], 96
    %114 = vst [vmem:[%s113] sm:$0xff] %v111
    %115 = vst [vmem:[%s113 + $0x8] sm:$0xff] %v112
    %v116 = vadd.f32 %v106, %v111
    %v117 = vadd.f32 %v107, %v112
    %s118 = scalar_lea.vmem [#allocation5], 112
    %v119 = vld [vmem:[%s118] sm:$0xff]
    %v120 = vld [vmem:[%s118 + $0x8] sm:$0xff]
    %v121 = vadd.f32 %v111, %v119
    %v122 = vadd.f32 %v112, %v120
    %s123 = scalar_lea.vmem [#allocation7], 112
    %124 = vst [vmem:[%s123] sm:$0xff] %v121
    %125 = vst [vmem:[%s123 + $0x8] sm:$0xff] %v122
    %v126 = vadd.f32 %v116, %v121
    %v127 = vadd.f32 %v117, %v122
    %v128 = vmul.f32 %v126, 0.125
    %v129 = vmul.f32 %v127, 0.125
    %130 = vst [vmem:[#allocation8] sm:$0xff] %v128
    %131 = vst [vmem:[#allocation8 + $0x8] sm:$0xff] %v129
    %v132 = vmin.f32 %v52, %v61
    %v133 = vmin.f32 %v53, %v62
    %v134 = vmax.f32 %v52, %v61
    %v135 = vmax.f32 %v53, %v62
    %v136 = vmin.f32 %v71, %v81
    %v137 = vmin.f32 %v72, %v82
    %v138 = vmax.f32 %v71, %v81
    %v139 = vmax.f32 %v72, %v82
    %v140 = vmin.f32 %v91, %v101
    %v141 = vmin.f32 %v92, %v102
    %v142 = vmax.f32 %v91, %v101
    %v143 = vmax.f32 %v92, %v102
    %v144 = vmin.f32 %v111, %v121
    %v145 = vmin.f32 %v112, %v122
    %v146 = vmax.f32 %v111, %v121
    %v147 = vmax.f32 %v112, %v122
    %v148 = vmin.f32 %v132, %v136
    %v149 = vmin.f32 %v133, %v137
    %v150 = vmax.f32 %v132, %v136
    %v151 = vmax.f32 %v133, %v137
    %v152 = vmin.f32 %v134, %v138
    %v153 = vmin.f32 %v135, %v139
    %v154 = vmax.f32 %v134, %v138
    %v155 = vmax.f32 %v135, %v139
    %v156 = vmin.f32 %v152, %v150
    %v157 = vmin.f32 %v153, %v151
    %v158 = vmax.f32 %v152, %v150
    %v159 = vmax.f32 %v153, %v151
    %v160 = vmin.f32 %v140, %v144
    %v161 = vmin.f32 %v141, %v145
    %v162 = vmax.f32 %v140, %v144
    %v163 = vmax.f32 %v141, %v145
    %v164 = vmin.f32 %v142, %v146
    %v165 = vmin.f32 %v143, %v147
    %v166 = vmax.f32 %v142, %v146
    %v167 = vmax.f32 %v143, %v147
    %v168 = vmin.f32 %v164, %v162
    %v169 = vmin.f32 %v165, %v163
    %v170 = vmax.f32 %v164, %v162
    %v171 = vmax.f32 %v165, %v163
    %v172 = vmin.f32 %v148, %v160
    %v173 = vmin.f32 %v149, %v161
    %v174 = vmax.f32 %v148, %v160
    %v175 = vmax.f32 %v149, %v161
    %v176 = vmin.f32 %v156, %v168
    %v177 = vmin.f32 %v157, %v169
    %v178 = vmax.f32 %v156, %v168
    %v179 = vmax.f32 %v157, %v169
    %v180 = vmin.f32 %v158, %v170
    %v181 = vmin.f32 %v159, %v171
    %v182 = vmax.f32 %v158, %v170
    %v183 = vmax.f32 %v159, %v171
    %v184 = vmin.f32 %v154, %v166
    %v185 = vmin.f32 %v155, %v167
    %v186 = vmax.f32 %v154, %v166
    %v187 = vmax.f32 %v155, %v167
    %v188 = vmin.f32 %v180, %v174
    %v189 = vmin.f32 %v181, %v175
    %v190 = vmax.f32 %v184, %v178
    %v191 = vmax.f32 %v185, %v179
    %v192 = vmin.f32 %v176, %v188
    %v193 = vmin.f32 %v177, %v189
    %v194 = vmax.f32 %v190, %v182
    %v195 = vmax.f32 %v191, %v183
    %v196 = vsub.f32 %v192, %v172
    %v197 = vsub.f32 %v193, %v173
    %v198 = vmul.f32 %v196, 0.175
    %v199 = vmul.f32 %v197, 0.175
    %v200 = vadd.f32 %v172, %v198
    %v201 = vadd.f32 %v173, %v199
    %202 = vst [vmem:[#allocation10] sm:$0xff] %v200
    %203 = vst [vmem:[#allocation10 + $0x8] sm:$0xff] %v201
    %v204 = vsub.f32 %v186, %v194
    %v205 = vsub.f32 %v187, %v195
    %v206 = vmul.f32 %v204, 0.825
    %v207 = vmul.f32 %v205, 0.825
    %v208 = vadd.f32 %v194, %v206
    %v209 = vadd.f32 %v195, %v207
    %210 = vst [vmem:[#allocation11] sm:$0xff] %v208
    %211 = vst [vmem:[#allocation11 + $0x8] sm:$0xff] %v209
    // Predicated region
    $region18: #{tpu_custom_call.1} parent=1 // pred_check
      _
    $region19: #{tpu_custom_call.1} parent=1 // pred_check_branch
      %213 = sbr.rel (0) target = $region21
    $region20: #{tpu_custom_call.1} parent=1 // pred_region
      %215 = vsyncadd [#allocation4], 0
      %s216 = sshll.u32 [#allocation7], 4
      %s217 = int_to_ptr.vmem [resolvable:$true] %s216
      %s218 = sshll.u32 %s2, 4
      %s219 = int_to_ptr.hbm [resolvable:$true] %s218
      %224 = dma.vmem_to_hbm [thread:$0]  %s217, 2048, %s219, [#allocation4], 256, 256, 16
    $region21: #{tpu_custom_call.1} parent=1 // pred_fallthru
      _
    // Predicated region
    $region22: #{tpu_custom_call.1} parent=1 // pred_check
      _
    $region23: #{tpu_custom_call.1} parent=1 // pred_check_branch
      %226 = sbr.rel (0) target = $region25
    $region24: #{tpu_custom_call.1} parent=1 // pred_region
      %228 = vsyncadd [#allocation9], 0
      %s230 = sshll.u32 [#allocation8], 4
      %s231 = int_to_ptr.vmem [resolvable:$true] %s230
      %s232 = sshll.u32 %s3, 4
      %s233 = int_to_ptr.hbm [resolvable:$true] %s232
      %235 = dma.vmem_to_hbm [thread:$0]  %s231, 256, %s233, [#allocation9]
    $region25: #{tpu_custom_call.1} parent=1 // pred_fallthru
      _
    // Predicated region
    $region26: #{tpu_custom_call.1} parent=1 // pred_check
      _
    $region27: #{tpu_custom_call.1} parent=1 // pred_check_branch
      %237 = sbr.rel (0) target = $region29
    $region28: #{tpu_custom_call.1} parent=1 // pred_region
      %239 = vsyncadd [#allocation9], 0
      %s241 = sshll.u32 [#allocation10], 4
      %s242 = int_to_ptr.vmem [resolvable:$true] %s241
      %s243 = sshll.u32 %s4, 4
      %s244 = int_to_ptr.hbm [resolvable:$true] %s243
      %246 = dma.vmem_to_hbm [thread:$0]  %s242, 256, %s244, [#allocation9]
    $region29: #{tpu_custom_call.1} parent=1 // pred_fallthru
      _
    // Predicated region
    $region30: #{tpu_custom_call.1} parent=1 // pred_check
      _
    $region31: #{tpu_custom_call.1} parent=1 // pred_check_branch
      %248 = sbr.rel (0) target = $region33
    $region32: #{tpu_custom_call.1} parent=1 // pred_region
      %250 = vsyncadd [#allocation12], 0
      %s252 = sshll.u32 [#allocation11], 4
      %s253 = int_to_ptr.vmem [resolvable:$true] %s252
      %s254 = sshll.u32 %s5, 4
      %s255 = int_to_ptr.hbm [resolvable:$true] %s254
      %257 = dma.vmem_to_hbm [thread:$0]  %s253, 256, %s255, [#allocation12]
    $region33: #{tpu_custom_call.1} parent=1 // pred_fallthru
      _
    // Predicated region
    $region34: #{tpu_custom_call.1} parent=1 // pred_check
      _
    $region35: #{tpu_custom_call.1} parent=1 // pred_check_branch
      %259 = sbr.rel (0) target = $region37
    $region36: #{tpu_custom_call.1} parent=1 // pred_region
      %261 = dma.done [#allocation4], 2048
    $region37: #{tpu_custom_call.1} parent=1 // pred_fallthru
      _
    // Predicated region
    $region38: #{tpu_custom_call.1} parent=1 // pred_check
      _
    $region39: #{tpu_custom_call.1} parent=1 // pred_check_branch
      %263 = sbr.rel (0) target = $region41
    $region40: #{tpu_custom_call.1} parent=1 // pred_region
      %265 = dma.done [#allocation9], 256
    $region41: #{tpu_custom_call.1} parent=1 // pred_fallthru
      _
    // Predicated region
    $region42: #{tpu_custom_call.1} parent=1 // pred_check
      _
    $region43: #{tpu_custom_call.1} parent=1 // pred_check_branch
      %267 = sbr.rel (0) target = $region45
    $region44: #{tpu_custom_call.1} parent=1 // pred_region
      %269 = dma.done [#allocation9], 256
    $region45: #{tpu_custom_call.1} parent=1 // pred_fallthru
      _
    // Predicated region
    $region46: #{tpu_custom_call.1} parent=1 // pred_check
      _
    $region47: #{tpu_custom_call.1} parent=1 // pred_check_branch
      %271 = sbr.rel (0) target = $region49
    $region48: #{tpu_custom_call.1} parent=1 // pred_region
      %273 = dma.done [#allocation12], 256
    $region49: #{tpu_custom_call.1} parent=1 // pred_fallthru
      _
    %274 = vsyncpa [#allocation3], 1
    %275 = vsyncpa [#allocation6], 1
    %276 = vsyncpa [#allocation4], 1
    %277 = vsyncpa [#allocation9], 1
    %278 = vsyncpa [#allocation12], 1

</llo_original>
